<compile_context>
chip_gen: v7x
topology: tpu7x:2x2x1
jax: 0.10.0
libtpu: 0.0.40
codegen_flags: <defaults>
</compile_context>

<pallas_src>
import jax
import jax.numpy as jnp
from jax.experimental import pallas as pl
from jax.experimental.pallas import tpu as pltpu

LANES = 128
SUBLANES = 8
MAX_TILE_ROWS = 2048      # 2048 x 128 x 4 B = 1 MiB per f32 input tile
NUM_CORE_SHARDS = 2       # exploit both TensorCores on v7x; harmless elsewhere


def _round_up(x, m):
    return ((x + m - 1) // m) * m


def _divergence_loss_kernel(ux_ref, vy_ref, wz_ref, out_ref):
    i = pl.program_id(1)  # inner reduction axis

    @pl.when(i == 0)
    def _():
        out_ref[...] = jnp.zeros_like(out_ref)

    div = (
        ux_ref[...].astype(jnp.float32)
        + vy_ref[...].astype(jnp.float32)
        + wz_ref[...].astype(jnp.float32)
    )
    sq = div * div
    # Collapse the tile's rows onto one vreg-shaped (8, 128) slab with pure
    # VPU adds; (T,128) -> (T/8, 8, 128) is layout-preserving (T % 8 == 0).
    out_ref[...] += jnp.sum(sq.reshape(-1, SUBLANES, LANES), axis=0)


def divergence_loss(u_x, v_y, w_z):
    """Pallas equivalent of Loss.forward: mean((u_x + v_y + w_z)**2)."""
    assert u_x.shape == v_y.shape == w_z.shape
    total_elems = u_x.size

    # Tile geometry: rows split into NUM_CORE_SHARDS x tiles_per_shard tiles
    # of tile_rows rows each (tile_rows multiple of 8, capped at 1 MiB f32).
    rows = pl.cdiv(total_elems, LANES)
    rows_per_shard = pl.cdiv(rows, NUM_CORE_SHARDS)
    tile_rows = min(MAX_TILE_ROWS, _round_up(rows_per_shard, SUBLANES))
    tiles_per_shard = pl.cdiv(rows_per_shard, tile_rows)
    padded_rows = NUM_CORE_SHARDS * tiles_per_shard * tile_rows
    padded_total = padded_rows * LANES

    def _prep(x):
        flat = x.reshape(-1)
        if padded_total > total_elems:
            flat = jnp.pad(flat, (0, padded_total - total_elems))
        return flat.reshape(padded_rows, LANES)

    ux2, vy2, wz2 = _prep(u_x), _prep(v_y), _prep(w_z)

    in_spec = pl.BlockSpec(
        (tile_rows, LANES), lambda c, i: (c * tiles_per_shard + i, 0)
    )
    # One (8, 128) accumulator slab per core-shard; constant block index
    # across the reduction axis keeps it VMEM-resident.
    out_spec = pl.BlockSpec((SUBLANES, LANES), lambda c, i: (c, 0))

    # VMEM budget: 3 inputs x 2 pipeline buffers x tile + small output slack.
    in_bytes = jnp.dtype(u_x.dtype).itemsize
    tile_bytes = tile_rows * LANES * in_bytes
    needed = 3 * 2 * tile_bytes + 4 * (SUBLANES * LANES * 4)
    vmem_limit = min(max(needed + (4 << 20), 16 << 20), 32 << 20)

    partials = pl.pallas_call(
        _divergence_loss_kernel,
        out_shape=jax.ShapeDtypeStruct(
            (NUM_CORE_SHARDS * SUBLANES, LANES), jnp.float32
        ),
        grid_spec=pltpu.PrefetchScalarGridSpec(
            num_scalar_prefetch=0,
            grid=(NUM_CORE_SHARDS, tiles_per_shard),
            in_specs=[in_spec, in_spec, in_spec],
            out_specs=out_spec,
        ),
        compiler_params=pltpu.CompilerParams(
            dimension_semantics=("parallel", "arbitrary"),
            vmem_limit_bytes=vmem_limit,
        ),
    )(ux2, vy2, wz2)

    # Tiny final reduction (2 x 8 x 128 values) + mean normalization in JAX.
    loss = jnp.sum(partials) / jnp.float32(total_elems)
    return {"divergence_loss": loss}


if __name__ == "__main__":
    key = jax.random.PRNGKey(0)
    k1, k2, k3 = jax.random.split(key, 3)
    shape = (2, 4, 16, 16)  # NCHW-style small test shape; 2048 elems
    u_x = jax.random.normal(k1, shape, dtype=jnp.float32)
    v_y = jax.random.normal(k2, shape, dtype=jnp.float32)
    w_z = jax.random.normal(k3, shape, dtype=jnp.float32)

    loss_fn = jax.jit(divergence_loss)

    result = loss_fn(u_x, v_y, w_z)
    loss = jax.block_until_ready(result["divergence_loss"])

    # reference check in plain JAX
    ref = jnp.mean(jnp.square(u_x + v_y + w_z))
    assert jnp.allclose(loss, ref, rtol=1e-5, atol=1e-6), (loss, ref)

    # also check a non-tile-divisible, larger shape to exercise padding path
    s2 = (3, 5, 17, 19)
    a = jax.random.normal(k1, s2, dtype=jnp.float32)
    b = jax.random.normal(k2, s2, dtype=jnp.float32)
    c = jax.random.normal(k3, s2, dtype=jnp.float32)
    loss2 = jax.block_until_ready(loss_fn(a, b, c)["divergence_loss"])
    ref2 = jnp.mean(jnp.square(a + b + c))
    assert jnp.allclose(loss2, ref2, rtol=1e-5, atol=1e-6), (loss2, ref2)

    print("KERNEL_OK")
</pallas_src>

<mosaic_0001>
module attributes {stable_mosaic.version = 11 : i64} {
  func.func @_divergence_loss_kernel(%arg0: i32, %arg1: i32, %arg2: memref<8x128xf32, #tpu.memory_space<vmem>>, %arg3: memref<8x128xf32, #tpu.memory_space<vmem>>, %arg4: memref<8x128xf32, #tpu.memory_space<vmem>>, %arg5: memref<8x128xf32, #tpu.memory_space<vmem>>) attributes {dimension_semantics = [#tpu.dimension_semantics<parallel>, #tpu.dimension_semantics<arbitrary>], iteration_bounds = array<i64: 2, 1>, scalar_prefetch = 0 : i64, scratch_operands = 0 : i64, tpu.core_type = #tpu.core_type<tc>, window_params = [{transform_indices = @transform_0, window_bounds = array<i64: 8, 128>}, {transform_indices = @transform_1, window_bounds = array<i64: 8, 128>}, {transform_indices = @transform_2, window_bounds = array<i64: 8, 128>}, {transform_indices = @transform_3, window_bounds = array<i64: 8, 128>}]} {
    %c0_i32 = arith.constant 0 : i32
    %0 = arith.cmpi eq, %arg1, %c0_i32 : i32
    %1 = arith.extui %0 : i1 to i32
    %c0_i32_0 = arith.constant 0 : i32
    %2 = arith.cmpi ne, %1, %c0_i32_0 : i32
    scf.if %2 {
      %cst_10 = arith.constant 0.000000e+00 : f32
      %14 = vector.broadcast %cst_10 : f32 to vector<8x128xf32>
      %c0_11 = arith.constant 0 : index
      %c0_12 = arith.constant 0 : index
      %15 = vector.load %arg5[%c0_11, %c0_12] : memref<8x128xf32, #tpu.memory_space<vmem>>, vector<8x128xf32>
      tpu.vector_store %arg5[%c0_11, %c0_12], %14 {strides = array<i32>} : memref<8x128xf32, #tpu.memory_space<vmem>>, vector<8x128xf32>,
    } else {
    }
    %c0 = arith.constant 0 : index
    %c0_1 = arith.constant 0 : index
    %3 = vector.load %arg2[%c0, %c0_1] : memref<8x128xf32, #tpu.memory_space<vmem>>, vector<8x128xf32>
    %c0_2 = arith.constant 0 : index
    %c0_3 = arith.constant 0 : index
    %4 = vector.load %arg3[%c0_2, %c0_3] : memref<8x128xf32, #tpu.memory_space<vmem>>, vector<8x128xf32>
    %5 = arith.addf %3, %4 : vector<8x128xf32>
    %c0_4 = arith.constant 0 : index
    %c0_5 = arith.constant 0 : index
    %6 = vector.load %arg4[%c0_4, %c0_5] : memref<8x128xf32, #tpu.memory_space<vmem>>, vector<8x128xf32>
    %7 = arith.addf %5, %6 : vector<8x128xf32>
    %8 = arith.mulf %7, %7 : vector<8x128xf32>
    %c0_6 = arith.constant 0 : index
    %c0_7 = arith.constant 0 : index
    %9 = vector.load %arg5[%c0_6, %c0_7] : memref<8x128xf32, #tpu.memory_space<vmem>>, vector<8x128xf32>
    %10 = vector.shape_cast %8 : vector<8x128xf32> to vector<1x8x128xf32>
    %cst = arith.constant dense<0.000000e+00> : vector<8x128xf32>
    %11 = vector.multi_reduction <add>, %10, %cst [0] : vector<1x8x128xf32> to vector<8x128xf32>
    %12 = arith.addf %9, %11 : vector<8x128xf32>
    %c0_8 = arith.constant 0 : index
    %c0_9 = arith.constant 0 : index
    %13 = vector.load %arg5[%c0_8, %c0_9] : memref<8x128xf32, #tpu.memory_space<vmem>>, vector<8x128xf32>
    tpu.vector_store %arg5[%c0_8, %c0_9], %12 {strides = array<i32>} : memref<8x128xf32, #tpu.memory_space<vmem>>, vector<8x128xf32>,
    return
  }
  func.func @transform_0(%arg0: i32, %arg1: i32) -> (i32, i32) {
    %c1_i32 = arith.constant 1 : i32
    %0 = arith.muli %arg0, %c1_i32 : i32
    %1 = arith.addi %0, %arg1 : i32
    %c0_i32 = arith.constant 0 : i32
    %c0_i32_0 = arith.constant 0 : i32
    return %1, %c0_i32 : i32, i32
  }
  func.func @transform_1(%arg0: i32, %arg1: i32) -> (i32, i32) {
    %c1_i32 = arith.constant 1 : i32
    %0 = arith.muli %arg0, %c1_i32 : i32
    %1 = arith.addi %0, %arg1 : i32
    %c0_i32 = arith.constant 0 : i32
    %c0_i32_0 = arith.constant 0 : i32
    return %1, %c0_i32 : i32, i32
  }
  func.func @transform_2(%arg0: i32, %arg1: i32) -> (i32, i32) {
    %c1_i32 = arith.constant 1 : i32
    %0 = arith.muli %arg0, %c1_i32 : i32
    %1 = arith.addi %0, %arg1 : i32
    %c0_i32 = arith.constant 0 : i32
    %c0_i32_0 = arith.constant 0 : i32
    return %1, %c0_i32 : i32, i32
  }
  func.func @transform_3(%arg0: i32, %arg1: i32) -> (i32, i32) {
    %c0_i32 = arith.constant 0 : i32
    %c0_i32_0 = arith.constant 0 : i32
    return %arg0, %c0_i32 : i32, i32
  }
}

</mosaic_0001>

<llo_original>
// kernel: divergence_loss.1
$region0: #{divergence_loss.1}
  #allocation0 [shape = 'u32[]', space=smem, size = 0x4, offset = 0x4, fixed_abs, tag = 'smem constant byte address 0x4 - core index']
  #allocation1 [shape = 'u32[144,128]{1,0:T(1,128)}', space=vmem, size = 0x12000, scoped, tag = 'internal scratch']
  %s0 = inlined_call_operand.vmem [shape: f32[16,128], index: 0, kind: input, shape index: {}]
  %s1 = inlined_call_operand.vmem [shape: f32[16,128], index: 1, kind: input, shape index: {}]
  %s2 = inlined_call_operand.vmem [shape: f32[16,128], index: 2, kind: input, shape index: {}]
  %s3 = inlined_call_operand.vmem [shape: f32[16,128], index: 3, kind: output, shape index: {}]
  %s4 = sld [smem:[#allocation0]]
  $region49: #{divergence_loss.1} parent=0
    _
  %s6 = ssub.s32 1, %s4
  %s7 = scalar_select 0, %s6, %s4
  loop: start=0, step=1, limit=4
  $region2: #{divergence_loss.1} parent=0 // loop_pre_header
    _
  $region3: #{divergence_loss.1} parent=0 // loop_header
    %s9 = sphi 0, %s13
    %p10 = scmp.ge.s32.totalorder %s9, 4
    %s16 = sphi 0, %s28
    %s17 = sphi 0, %s24
    %s18 = sphi 0, %s16
    %s19 = sphi 0, %s17
    %s20 = sphi 0, %s18
    %s21 = sphi 0, %s19
    %s33 = sphi 0, %s35
    %s36 = sphi 0, %s33
    %s37 = sphi 0, %s36
    %s53 = sphi 0, %s37
    %s61 = sphi 0, %s63
    %s64 = sphi 0, %s61
    %s65 = sphi 0, %s64
    %s81 = sphi 0, %s65
    %s89 = sphi 0, %s91
    %s92 = sphi 0, %s89
    %s93 = sphi 0, %s92
    %s109 = sphi 0, %s93
    %s115 = sphi 0, %s117
    %s118 = sphi 0, %s115
    %s119 = sphi 0, %s118
    %s135 = sphi 0, %s119
  $region4: #{divergence_loss.1} parent=0 // loop_header_branch
    %12 = sbr.rel (%p10) target = $region8
  $region5: #{divergence_loss.1} parent=0 // loop_body
    %s14 = ssub.s32 %s9, 1
    %s15 = ssub.s32 %s9, 2
    %s22 = sadd.s32 1, %s17
    %p23 = scmp.ge.s32.totalorder %s22, 1
    %s24 = scalar_select %p23, 0, %s22
    %s25 = sadd.s32 1, %s16
    %s26 = scalar_select %p23, %s25, %s16
    %p27 = scmp.ge.s32.totalorder %s26, 2
    %s28 = scalar_select %p27, 0, %s26
    %s29 = sadd.s32 %s16, %s17
    %s30 = sadd.s32 %s28, %s24
    %s31 = ssub.s32 %s29, %s30
    %p32 = scmp.eq.s32.totalorder %s31, 0
    %s34 = sadd.s32 %s33, 1
    %s35 = scalar_select %p32, %s33, %s34
    %p38 = pneg %p32
    %p39 = scmp.eq.s32.totalorder %s9, 1
    %p40 = por %p38, %p39
    %p41 = scmp.ne.s32.totalorder %s33, %s36
    %p42 = scmp.eq.s32.totalorder %s9, 0
    %p43 = por %p41, %p42
    %p44 = scmp.ne.s32.totalorder %s33, %s36
    %p45 = scmp.eq.s32.totalorder %s14, 1
    %p46 = por %p44, %p45
    %p47 = scmp.ne.s32.totalorder %s36, %s37
    %p48 = scmp.eq.s32.totalorder %s14, 0
    %p49 = por %p47, %p48
    %p50 = scmp.ne.s32.totalorder %s36, %s37
    %p51 = scmp.eq.s32.totalorder %s15, 1
    %p52 = por %p50, %p51
    %p54 = scmp.ne.s32.totalorder %s37, %s53
    %p55 = scmp.eq.s32.totalorder %s15, 0
    %p56 = por %p54, %p55
    %s57 = sadd.s32 %s16, %s17
    %s58 = sadd.s32 %s28, %s24
    %s59 = ssub.s32 %s57, %s58
    %p60 = scmp.eq.s32.totalorder %s59, 0
    %s62 = sadd.s32 %s61, 1
    %s63 = scalar_select %p60, %s61, %s62
    %p66 = pneg %p60
    %p67 = scmp.eq.s32.totalorder %s9, 1
    %p68 = por %p66, %p67
    %p69 = scmp.ne.s32.totalorder %s61, %s64
    %p70 = scmp.eq.s32.totalorder %s9, 0
    %p71 = por %p69, %p70
    %p72 = scmp.ne.s32.totalorder %s61, %s64
    %p73 = scmp.eq.s32.totalorder %s14, 1
    %p74 = por %p72, %p73
    %p75 = scmp.ne.s32.totalorder %s64, %s65
    %p76 = scmp.eq.s32.totalorder %s14, 0
    %p77 = por %p75, %p76
    %p78 = scmp.ne.s32.totalorder %s64, %s65
    %p79 = scmp.eq.s32.totalorder %s15, 1
    %p80 = por %p78, %p79
    %p82 = scmp.ne.s32.totalorder %s65, %s81
    %p83 = scmp.eq.s32.totalorder %s15, 0
    %p84 = por %p82, %p83
    %s85 = sadd.s32 %s16, %s17
    %s86 = sadd.s32 %s28, %s24
    %s87 = ssub.s32 %s85, %s86
    %p88 = scmp.eq.s32.totalorder %s87, 0
    %s90 = sadd.s32 %s89, 1
    %s91 = scalar_select %p88, %s89, %s90
    %p94 = pneg %p88
    %p95 = scmp.eq.s32.totalorder %s9, 1
    %p96 = por %p94, %p95
    %p97 = scmp.ne.s32.totalorder %s89, %s92
    %p98 = scmp.eq.s32.totalorder %s9, 0
    %p99 = por %p97, %p98
    %p100 = scmp.ne.s32.totalorder %s89, %s92
    %p101 = scmp.eq.s32.totalorder %s14, 1
    %p102 = por %p100, %p101
    %p103 = scmp.ne.s32.totalorder %s92, %s93
    %p104 = scmp.eq.s32.totalorder %s14, 0
    %p105 = por %p103, %p104
    %p106 = scmp.ne.s32.totalorder %s92, %s93
    %p107 = scmp.eq.s32.totalorder %s15, 1
    %p108 = por %p106, %p107
    %p110 = scmp.ne.s32.totalorder %s93, %s109
    %p111 = scmp.eq.s32.totalorder %s15, 0
    %p112 = por %p110, %p111
    %s113 = ssub.s32 %s16, %s28
    %p114 = scmp.eq.s32.totalorder %s113, 0
    %s116 = sadd.s32 %s115, 1
    %s117 = scalar_select %p114, %s115, %s116
    %p120 = pneg %p114
    %p121 = scmp.eq.s32.totalorder %s9, 1
    %p122 = por %p120, %p121
    %p123 = scmp.ne.s32.totalorder %s115, %s118
    %p124 = scmp.eq.s32.totalorder %s9, 0
    %p125 = por %p123, %p124
    %p126 = scmp.ne.s32.totalorder %s115, %s118
    %p127 = scmp.eq.s32.totalorder %s14, 1
    %p128 = por %p126, %p127
    %p129 = scmp.ne.s32.totalorder %s118, %s119
    %p130 = scmp.eq.s32.totalorder %s14, 0
    %p131 = por %p129, %p130
    %p132 = scmp.ne.s32.totalorder %s118, %s119
    %p133 = scmp.eq.s32.totalorder %s15, 1
    %p134 = por %p132, %p133
    %p136 = scmp.ne.s32.totalorder %s119, %s135
    %p137 = scmp.eq.s32.totalorder %s15, 0
    %p138 = por %p136, %p137
    %p139 = scmp.le.s32.totalorder 1, %s9
    %p140 = scmp.lt.s32.totalorder %s9, 3
    %p141 = pnand %p139, %p140
    %p142 = pneg %p141
    // Predicated region
    $region9: #{divergence_loss.1} parent=5 // pred_check
      _
    $region10: #{divergence_loss.1} parent=5 // pred_check_branch
      %144 = sbr.rel (%p141) target = $region12
    $region11: #{divergence_loss.1} parent=5 // pred_region
      %s145 = ssub.s32 %s9, 1
    $region12: #{divergence_loss.1} parent=5 // pred_fallthru
      _
    %p146 = scmp.lt.s32.totalorder %s9, 2
    // Predicated region
    $region13: #{divergence_loss.1} parent=5 // pred_check
      %p147 = pneg %p146
    $region14: #{divergence_loss.1} parent=5 // pred_check_branch
      %149 = sbr.rel (%p147) target = $region16
    $region15: #{divergence_loss.1} parent=5 // pred_region
      // Predicated region
      $region17: #{divergence_loss.1} parent=15 // pred_check
        %p150 = pneg %p43
      $region18: #{divergence_loss.1} parent=15 // pred_check_branch
        %152 = sbr.rel (%p150) target = $region20
      $region19: #{divergence_loss.1} parent=15 // pred_region
        %s153 = sadd.s32 %s16, %s17
        %p154 = scmp.lt.s32.totalorder %s153, 1
        %s155 = scalar_select %p154, %s153, 1
        %s156 = smul.addr %s155, 8
        %s157 = scalar_lea.vmem %s0, %s156
        %s158 = sadd.s32 %s16, %s17
      $region20: #{divergence_loss.1} parent=15 // pred_fallthru
        _
      // Predicated region
      $region21: #{divergence_loss.1} parent=15 // pred_check
        %p159 = pneg %p71
      $region22: #{divergence_loss.1} parent=15 // pred_check_branch
        %161 = sbr.rel (%p159) target = $region24
      $region23: #{divergence_loss.1} parent=15 // pred_region
        %s162 = sadd.s32 %s16, %s17
        %p163 = scmp.lt.s32.totalorder %s162, 1
        %s164 = scalar_select %p163, %s162, 1
        %s165 = smul.addr %s164, 8
        %s166 = scalar_lea.vmem %s1, %s165
        %s167 = sadd.s32 %s16, %s17
      $region24: #{divergence_loss.1} parent=15 // pred_fallthru
        _
      // Predicated region
      $region25: #{divergence_loss.1} parent=15 // pred_check
        %p168 = pneg %p99
      $region26: #{divergence_loss.1} parent=15 // pred_check_branch
        %170 = sbr.rel (%p168) target = $region28
      $region27: #{divergence_loss.1} parent=15 // pred_region
        %s171 = sadd.s32 %s16, %s17
        %p172 = scmp.lt.s32.totalorder %s171, 1
        %s173 = scalar_select %p172, %s171, 1
        %s174 = smul.addr %s173, 8
        %s175 = scalar_lea.vmem %s2, %s174
        %s176 = sadd.s32 %s16, %s17
      $region28: #{divergence_loss.1} parent=15 // pred_fallthru
        _
    $region16: #{divergence_loss.1} parent=5 // pred_fallthru
      _
    %p177 = scmp.le.s32.totalorder 1, %s9
    %p178 = scmp.lt.s32.totalorder %s9, 3
    %p179 = pnand %p177, %p178
    %p180 = pneg %p179
    // Predicated region
    $region29: #{divergence_loss.1} parent=5 // pred_check
      _
    $region30: #{divergence_loss.1} parent=5 // pred_check_branch
      %182 = sbr.rel (%p179) target = $region32
    $region31: #{divergence_loss.1} parent=5 // pred_region
      %s183 = ssub.s32 %s9, 1
      %s184 = sadd.s32 %s18, %s19
      %p185 = scmp.lt.s32.totalorder %s184, 1
      %s186 = scalar_select %p185, %s184, 1
      %s187 = smul.addr %s186, 8
      %s188 = scalar_lea.vmem %s0, %s187
      %p189 = pneg %p49
      %p190 = pneg %p46
      %s191 = sadd.s32 %s18, %s19
      %p192 = scmp.lt.s32.totalorder %s191, 1
      %s193 = scalar_select %p192, %s191, 1
      %s194 = smul.addr %s193, 8
      %s195 = scalar_lea.vmem %s1, %s194
      %p196 = pneg %p77
      %p197 = pneg %p74
      %s198 = sadd.s32 %s18, %s19
      %p199 = scmp.lt.s32.totalorder %s198, 1
      %s200 = scalar_select %p199, %s198, 1
      %s201 = smul.addr %s200, 8
      %s202 = scalar_lea.vmem %s2, %s201
      %p203 = pneg %p105
      %p204 = pneg %p102
      %p205 = pneg %p131
      %p206 = pneg %p128
      %p207 = scmp.lt.s32.totalorder %s18, 1
      %s208 = scalar_select %p207, %s18, 1
      %s209 = smul.addr %s208, 8
      %s210 = scalar_lea.vmem %s3, %s209
      %s211 = sadd.s32 %s18, %s19
      %p212 = scmp.lt.s32.totalorder %s211, 1
      %s213 = scalar_select %p212, %s211, 1
      %s214 = smul.addr %s213, 8
      %s215 = scalar_lea.vmem %s0, %s214
      %s216 = sadd.s32 %s18, %s19
      %s217 = sadd.s32 %s18, %s19
      %p218 = scmp.lt.s32.totalorder %s217, 1
      %s219 = scalar_select %p218, %s217, 1
      %s220 = smul.addr %s219, 8
      %s221 = scalar_lea.vmem %s1, %s220
      %s222 = sadd.s32 %s18, %s19
      %s223 = sadd.s32 %s18, %s19
      %p224 = scmp.lt.s32.totalorder %s223, 1
      %s225 = scalar_select %p224, %s223, 1
      %s226 = smul.addr %s225, 8
      %s227 = scalar_lea.vmem %s2, %s226
      %s228 = sadd.s32 %s18, %s19
      %p229 = scmp.lt.s32.totalorder %s18, 1
      %s230 = scalar_select %p229, %s18, 1
      %s231 = smul.addr %s230, 8
      %s232 = scalar_lea.vmem %s3, %s231
      %p233 = scmp.eq.s32.totalorder %s19, 0
      // Predicated region
      $region33: #{divergence_loss.1} parent=31 // pred_check
        %p234 = pneg %p233
      $region34: #{divergence_loss.1} parent=31 // pred_check_branch
        %236 = sbr.rel (%p234) target = $region36
      $region35: #{divergence_loss.1} parent=31 // pred_region
        %237 = vst [vmem:[%s232] sm:$0xff] 0.0
      $region36: #{divergence_loss.1} parent=31 // pred_fallthru
        _
      %v238 = vld [vmem:[%s215] sm:$0xff]
      %v239 = vld [vmem:[%s221] sm:$0xff]
      %v240 = vadd.f32 %v238, %v239
      %v241 = vld [vmem:[%s227] sm:$0xff]
      %v242 = vadd.f32 %v240, %v241
      %v243 = vmul.f32 %v242, %v242
      %v244 = vld [vmem:[%s232] sm:$0xff]
      %v245 = vadd.f32 %v243, 0.0
      %v246 = vadd.f32 %v244, %v245
      %247 = vst [vmem:[%s232] sm:$0xff] %v246
      %p248 = scmp.lt.s32.totalorder %s18, 1
      %s249 = scalar_select %p248, %s18, 1
      %s250 = smul.addr %s249, 8
      %s251 = scalar_lea.vmem %s3, %s250
      // Predicated region
      $region37: #{divergence_loss.1} parent=31 // pred_check
        %p252 = pneg %p128
      $region38: #{divergence_loss.1} parent=31 // pred_check_branch
        %254 = sbr.rel (%p252) target = $region40
      $region39: #{divergence_loss.1} parent=31 // pred_region
        _
      $region40: #{divergence_loss.1} parent=31 // pred_fallthru
        _
    $region32: #{divergence_loss.1} parent=5 // pred_fallthru
      _
    %p255 = scmp.le.s32.totalorder 2, %s9
    // Predicated region
    $region41: #{divergence_loss.1} parent=5 // pred_check
      %p256 = pneg %p255
    $region42: #{divergence_loss.1} parent=5 // pred_check_branch
      %258 = sbr.rel (%p256) target = $region44
    $region43: #{divergence_loss.1} parent=5 // pred_region
      %s259 = ssub.s32 %s9, 2
      // Predicated region
      $region45: #{divergence_loss.1} parent=43 // pred_check
        %p260 = pneg %p134
      $region46: #{divergence_loss.1} parent=43 // pred_check_branch
        %262 = sbr.rel (%p260) target = $region48
      $region47: #{divergence_loss.1} parent=43 // pred_region
        %p263 = scmp.lt.s32.totalorder %s20, 1
        %s264 = scalar_select %p263, %s20, 1
        %s265 = smul.addr %s264, 8
        %s266 = scalar_lea.vmem %s3, %s265
      $region48: #{divergence_loss.1} parent=43 // pred_fallthru
        _
    $region44: #{divergence_loss.1} parent=5 // pred_fallthru
      _
  $region6: #{divergence_loss.1} parent=0 // loop_footer
    %s13 = sadd.s32 1, %s9
  $region7: #{divergence_loss.1} parent=0 // loop_footer_branch
    %8 = sbr.rel target = $region3
  $region8: #{divergence_loss.1} parent=0 // loop_exit
    _

</llo_original>
